<compile_context>
chip_gen: v6e
topology: v6e:2x2x1
jax: 0.10.0
libtpu: 0.0.40
codegen_flags: <defaults>
</compile_context>

<pallas_src>
import numpy as np
import jax
import jax.numpy as jnp
from jax.experimental import pallas as pl
from jax.experimental.pallas import tpu as pltpu


def _round_up(x, m):
    return ((x + m - 1) // m) * m


# ---------------------------------------------------------------------------
# Parameter construction (mirrors Synthesis.__init__ / initialize / GLA)
# ---------------------------------------------------------------------------
def gla_window(wsz, hop):
    """LSEE-MSTFT synthesis window (Griffin & Lim).  np.hamming matches the
    scipy.signal.hamming(sym=True) used by the reference code."""
    synw = np.hamming(wsz)
    synw_prod = (synw ** 2.0).reshape(wsz, 1)
    redundancy = wsz // hop
    env = np.zeros((wsz, 1))
    for k in range(-redundancy, redundancy + 1):
        env_ind = hop * k + np.arange(1, wsz + 1)
        win_ind = np.arange(1, wsz + 1)
        valid = np.where((env_ind > 0) & (env_ind <= wsz))
        env_ind = env_ind[valid] - 1
        win_ind = win_ind[valid] - 1
        env[env_ind] += synw_prod[win_ind]
    return synw / env[:, 0]


def make_synthesis_weights(sz, hop):
    """ConvTranspose1d weights (in_ch=sz, out_ch=1, k=sz): W[c, k] real / imag."""
    f_matrix = np.fft.fft(np.eye(sz), norm='ortho')
    w = gla_window(sz, hop)
    w_real = (np.real(f_matrix) * w).astype(np.float32)   # (sz, sz)
    w_imag = (np.imag(f_matrix) * w).astype(np.float32)   # (sz, sz)
    return w_real, w_imag


def num_overlap_frames(sz, hop):
    """F: number of frames overlapping one hop of cropped output."""
    return (sz - 1) // hop + 1


def make_band_weights(w_real, w_imag, sz, hop, dtype=jnp.bfloat16):
    """Constant band-weight matrix W : (Kh_pad, F*hop).

    Column block r holds the contribution of frame (n+1+r) to output row n
    (one hop of cropped samples).  Folds in:
      * conjugate-symmetric mirroring of the rfft half spectrum (linear),
      * the ConvTranspose1d DFT/GLA basis,
      * overlap-add and the [sz:-sz] crop alignment.
    Built once per (sz, hop) on the host -- hoisted out of the forward path.
    """
    half_N = sz // 2 + 1
    F = num_overlap_frames(sz, hop)
    Kh = 2 * half_N
    Kh_pad = _round_up(Kh, 128)

    wr = w_real.astype(np.float64)
    wi = w_imag.astype(np.float64)
    # Fold mirrored bins into the half-spectrum rows:
    #   real_full[c] =  real[sz-c]  (c in [half_N, sz))  ->  Wr[k] += Wr_full[sz-k]
    #   imag_full[c] = -imag[sz-c]                        ->  Wi[k] -= Wi_full[sz-k]
    wr_fold = wr[:half_N].copy()
    wi_fold = wi[:half_N].copy()
    wr_fold[1:half_N - 1] += wr[sz - 1:half_N - 1:-1]
    wi_fold[1:half_N - 1] -= wi[sz - 1:half_N - 1:-1]
    w_fold = np.concatenate([wr_fold, wi_fold], axis=0)        # (Kh, sz)

    w_cat = np.zeros((Kh_pad, F * hop), dtype=np.float32)
    for r in range(F):
        # Output row n, column u, frame j=n+1+r hits kernel tap p = u + sz - (1+r)*hop.
        u_lo = max(0, (1 + r) * hop - sz)
        off_lo = u_lo + sz - (1 + r) * hop
        width = hop - u_lo
        w_cat[:Kh, r * hop + u_lo:(r + 1) * hop] = w_fold[:, off_lo:off_lo + width]
    return jnp.asarray(w_cat, dtype=dtype)


# ---------------------------------------------------------------------------
# Pallas kernel
# ---------------------------------------------------------------------------
def _synthesis_kernel(x_ref, halo_ref, w_ref, o_ref):
    # x_ref    : (1, tm, Kh_pad)   bf16   tm consecutive frames (shifted spectra)
    # halo_ref : (1, H,  Kh_pad)   bf16   first H frames of the NEXT main block
    # w_ref    : (Kh_pad, F*tn)    bf16   resident band weights (constant index_map)
    # o_ref    : (1, tm, tn)              one block of cropped output rows
    tm = x_ref.shape[1]
    tn = o_ref.shape[2]
    F = w_ref.shape[1] // tn

    # (tm + H, Kh_pad): aligned sublane concat (tm, H are multiples of 16).
    xe = jnp.concatenate([x_ref[0], halo_ref[0]], axis=0)
    # One MXU matmul covering all F shifted weight blocks; f32 accumulation.
    p = jnp.dot(xe, w_ref[...], preferred_element_type=jnp.float32)  # (tm+H, F*tn)

    # Output row i needs frame i+r for shift r -> take rows [r, r+tm) of block r.
    acc = p[0:tm, 0:tn]
    for r in range(1, F):
        acc = acc + p[r:r + tm, r * tn:(r + 1) * tn]
    o_ref[0] = acc.astype(o_ref.dtype)


# ---------------------------------------------------------------------------
# Synthesis.forward
# ---------------------------------------------------------------------------
def synthesis_forward(real, imag, w_cat, sz, hop, *, tm=512,
                      out_dtype=jnp.float32):
    """real, imag: (B, T, half_N) rfft spectra (same layout the PyTorch module
    receives before its internal transpose).  Returns (B, (T-1)*hop - sz),
    i.e. wave_form[:, sz:-sz] of the reference module."""
    B, T, half_N = real.shape
    assert half_N == sz // 2 + 1
    F = num_overlap_frames(sz, hop)
    Kh = 2 * half_N
    Kh_pad = _round_up(Kh, 128)
    assert w_cat.shape == (Kh_pad, F * hop), (w_cat.shape, (Kh_pad, F * hop))

    L_out = (T - 1) * hop - sz
    assert L_out > 0, "need (T-1)*hop > sz so the cropped output is non-empty"
    n_rows = pl.cdiv(L_out, hop)           # output rows (one hop each)

    # Halo length: >= F-1 frames, padded for bf16 sublane packing.
    H = _round_up(F, 16)
    tm_eff = max(H, min(tm, _round_up(n_rows, H)))
    tm_eff = _round_up(tm_eff, H)
    # Keep enough grid steps so both v7x TensorCores stay busy on small inputs.
    while B * pl.cdiv(n_rows, tm_eff) < 8 and tm_eff > H:
        tm_eff = _round_up(tm_eff // 2, H)
    n_m = pl.cdiv(n_rows, tm_eff)
    rows_pad = n_m * tm_eff
    T_x = rows_pad + H                     # frames the kernel may touch

    # Single fused pre-pass (the only XLA glue): concat [real|imag], drop frame
    # 0 (it only feeds the cropped left margin), cast to bf16 BEFORE any
    # materialization, zero-pad frames to T_x and features to Kh_pad.
    x = jnp.concatenate([real, imag], axis=-1)[:, 1:, :].astype(w_cat.dtype)
    tpad = T_x - (T - 1)
    if tpad < 0:
        x = x[:, :T_x, :]
        tpad = 0
    x = jnp.pad(x, ((0, 0), (0, tpad), (0, Kh_pad - Kh)))      # (B, T_x, Kh_pad)

    t_ratio = tm_eff // H                  # halo block index stride

    flops = 2 * B * n_m * (tm_eff + H) * Kh_pad * (F * hop)
    bytes_accessed = (x.size * x.dtype.itemsize
                      + w_cat.size * w_cat.dtype.itemsize
                      + B * rows_pad * hop * np.dtype(out_dtype).itemsize)

    out = pl.pallas_call(
        _synthesis_kernel,
        out_shape=jax.ShapeDtypeStruct((B, rows_pad, hop), out_dtype),
        grid=(B, n_m),
        in_specs=[
            # Main block: tm consecutive frames (each frame read ~once from HBM).
            pl.BlockSpec((1, tm_eff, Kh_pad), lambda b, m: (b, m, 0)),
            # Halo: first H frames of the next main block (same array, tiny DMA).
            pl.BlockSpec((1, H, Kh_pad), lambda b, m: (b, (m + 1) * t_ratio, 0)),
            # Band weights: constant block index -> VMEM resident, no re-DMA.
            pl.BlockSpec((Kh_pad, F * hop), lambda b, m: (0, 0)),
        ],
        out_specs=pl.BlockSpec((1, tm_eff, hop), lambda b, m: (b, m, 0)),
        compiler_params=pltpu.CompilerParams(
            dimension_semantics=("parallel", "parallel"),
            vmem_limit_bytes=32 * 1024 * 1024),
        cost_estimate=pl.CostEstimate(flops=flops, transcendentals=0,
                                      bytes_accessed=bytes_accessed),
    )(x, x, w_cat)

    wave = out.reshape(B, rows_pad * hop)[:, :L_out]
    return wave


# ---------------------------------------------------------------------------
# Reference (PyTorch semantics): mirror spectrum, conv-transpose overlap-add, crop.
# ---------------------------------------------------------------------------
def reference_forward(real, imag, w_real, w_imag, sz, hop):
    r = np.asarray(real, dtype=np.float64)
    im = np.asarray(imag, dtype=np.float64)
    B, T, _ = r.shape
    r_t = np.transpose(r, (0, 2, 1))
    i_t = np.transpose(im, (0, 2, 1))
    r_full = np.concatenate([r_t, r_t[:, 1:-1, :][:, ::-1, :]], axis=1)   # (B, sz, T)
    i_full = np.concatenate([i_t, -i_t[:, 1:-1, :][:, ::-1, :]], axis=1)
    wr = w_real.astype(np.float64)
    wi = w_imag.astype(np.float64)
    L = (T - 1) * hop + sz
    wave = np.zeros((B, L), dtype=np.float64)
    for j in range(T):
        frame = r_full[:, :, j] @ wr + i_full[:, :, j] @ wi               # (B, sz)
        wave[:, j * hop:j * hop + sz] += frame
    return wave[:, sz:L - sz]


if __name__ == "__main__":
    def run_case(name, sz, hop, B, T, tm, atol):
        half_N = sz // 2 + 1
        key = jax.random.PRNGKey(0)
        k1, k2 = jax.random.split(key)
        real = jax.random.normal(k1, (B, T, half_N), dtype=jnp.float32)
        imag = jax.random.normal(k2, (B, T, half_N), dtype=jnp.float32)

        # One-time setup (hoisted out of the forward path).
        w_real, w_imag = make_synthesis_weights(sz, hop)
        w_cat = make_band_weights(w_real, w_imag, sz, hop, dtype=jnp.bfloat16)

        fwd = jax.jit(synthesis_forward, static_argnames=("sz", "hop", "tm"))
        out = fwd(real, imag, w_cat, sz=sz, hop=hop, tm=tm)
        out = jax.block_until_ready(out)

        ref = reference_forward(real, imag, w_real, w_imag, sz, hop)
        assert out.shape == ref.shape, (name, out.shape, ref.shape)
        # bf16 operands with f32 accumulation -> loosened tolerance.
        np.testing.assert_allclose(np.asarray(out, dtype=np.float64), ref,
                                   rtol=5e-2, atol=atol, err_msg=name)

    # Toy config: small sz/hop, multi-block M grid so the halo path is exercised
    # across block boundaries (F=2).
    run_case("toy", sz=64, hop=32, B=2, T=48, tm=16, atol=5e-2)
    # Near-real band structure (ft_size=1024, hop=384 -> F=3, partially-zero
    # last weight block), small T so the numpy reference stays cheap.  tm=16
    # again forces several grid steps with real halo data.
    run_case("near_real", sz=1024, hop=384, B=2, T=40, tm=16, atol=5e-2)

    print("KERNEL_OK")
</pallas_src>

<mosaic_0001>
module attributes {stable_mosaic.version = 11 : i64} {
  func.func @_synthesis_kernel(%arg0: i32, %arg1: i32, %arg2: memref<1x16x128xbf16, #tpu.memory_space<vmem>>, %arg3: memref<1x16x128xbf16, #tpu.memory_space<vmem>>, %arg4: memref<128x64xbf16, #tpu.memory_space<vmem>>, %arg5: memref<1x16x32xf32, #tpu.memory_space<vmem>>) attributes {dimension_semantics = [#tpu.dimension_semantics<parallel>, #tpu.dimension_semantics<parallel>], iteration_bounds = array<i64: 2, 3>, scalar_prefetch = 0 : i64, scratch_operands = 0 : i64, tpu.core_type = #tpu.core_type<tc>, window_params = [{transform_indices = @transform_0, window_bounds = array<i64: 1, 16, 128>}, {transform_indices = @transform_1, window_bounds = array<i64: 1, 16, 128>}, {pipeline_mode = #tpu.pipeline_mode<synchronous>, transform_indices = @transform_2, window_bounds = array<i64: 128, 64>}, {transform_indices = @transform_3, window_bounds = array<i64: 1, 16, 32>}]} {
    %c0 = arith.constant 0 : index
    %c0_0 = arith.constant 0 : index
    %c0_1 = arith.constant 0 : index
    %0 = vector.load %arg2[%c0, %c0_0, %c0_1] : memref<1x16x128xbf16, #tpu.memory_space<vmem>>, vector<1x16x128xbf16>
    %1 = vector.shape_cast %0 : vector<1x16x128xbf16> to vector<16x128xbf16>
    %c0_2 = arith.constant 0 : index
    %c0_3 = arith.constant 0 : index
    %c0_4 = arith.constant 0 : index
    %2 = vector.load %arg3[%c0_2, %c0_3, %c0_4] : memref<1x16x128xbf16, #tpu.memory_space<vmem>>, vector<1x16x128xbf16>
    %3 = vector.shape_cast %2 : vector<1x16x128xbf16> to vector<16x128xbf16>
    %4 = tpu.concatenate %1, %3 in 0 : vector<16x128xbf16>, vector<16x128xbf16> -> vector<32x128xbf16>
    %c0_5 = arith.constant 0 : index
    %c0_6 = arith.constant 0 : index
    %5 = vector.load %arg4[%c0_5, %c0_6] : memref<128x64xbf16, #tpu.memory_space<vmem>>, vector<128x64xbf16>
    %cst = arith.constant dense<0.000000e+00> : vector<32x64xf32>
    %6 = tpu.matmul %4, %5, %cst {dimension_numbers = #tpu.dot_dimension_numbers<[1], [0], [0], [1], [0, 0, 1, 1], [], []>} : vector<32x128xbf16>, vector<128x64xbf16>, vector<32x64xf32> -> vector<32x64xf32>
    %7 = vector.extract_strided_slice %6 {offsets = [0, 0], sizes = [16, 32], strides = [1, 1]} : vector<32x64xf32> to vector<16x32xf32>
    %8 = vector.extract_strided_slice %6 {offsets = [1, 32], sizes = [16, 32], strides = [1, 1]} : vector<32x64xf32> to vector<16x32xf32>
    %9 = arith.addf %7, %8 : vector<16x32xf32>
    %c0_7 = arith.constant 0 : index
    %c0_8 = arith.constant 0 : index
    %c0_9 = arith.constant 0 : index
    %10 = vector.load %arg5[%c0_7, %c0_8, %c0_9] : memref<1x16x32xf32, #tpu.memory_space<vmem>>, vector<1x16x32xf32>
    %11 = vector.shape_cast %10 : vector<1x16x32xf32> to vector<16x32xf32>
    %12 = vector.shape_cast %9 : vector<16x32xf32> to vector<1x16x32xf32>
    tpu.vector_store %arg5[%c0_7, %c0_8, %c0_9], %12 {strides = array<i32>} : memref<1x16x32xf32, #tpu.memory_space<vmem>>, vector<1x16x32xf32>,
    return
  }
  func.func @transform_0(%arg0: i32, %arg1: i32) -> (i32, i32, i32) {
    %c0_i32 = arith.constant 0 : i32
    %c0_i32_0 = arith.constant 0 : i32
    return %arg0, %arg1, %c0_i32 : i32, i32, i32
  }
  func.func @transform_1(%arg0: i32, %arg1: i32) -> (i32, i32, i32) {
    %c1_i32 = arith.constant 1 : i32
    %0 = arith.addi %arg1, %c1_i32 : i32
    %c1_i32_0 = arith.constant 1 : i32
    %1 = arith.muli %0, %c1_i32_0 : i32
    %c0_i32 = arith.constant 0 : i32
    %c0_i32_1 = arith.constant 0 : i32
    return %arg0, %1, %c0_i32 : i32, i32, i32
  }
  func.func @transform_2(%arg0: i32, %arg1: i32) -> (i32, i32) {
    %c0_i32 = arith.constant 0 : i32
    %c0_i32_0 = arith.constant 0 : i32
    %c0_i32_1 = arith.constant 0 : i32
    return %c0_i32, %c0_i32_0 : i32, i32
  }
  func.func @transform_3(%arg0: i32, %arg1: i32) -> (i32, i32, i32) {
    %c0_i32 = arith.constant 0 : i32
    %c0_i32_0 = arith.constant 0 : i32
    return %arg0, %arg1, %c0_i32 : i32, i32, i32
  }
}

</mosaic_0001>

<llo_original>
// kernel: synthesis_forward.1
$region0: #{synthesis_forward.1}
  #allocation0 [shape = 'u32[]', space=smem, size = 0x4, offset = 0x4, fixed_abs, tag = 'smem constant byte address 0x4 - core index']
  #allocation1 [shape = 'u32[144,128]{1,0:T(1,128)}', space=vmem, size = 0x12000, scoped, tag = 'internal scratch']
  %s0 = inlined_call_operand.vmem [shape: bf16[2,64,128], index: 0, kind: input, shape index: {}, may-alias: {0,1}]
  %s1 = inlined_call_operand.vmem [shape: bf16[2,64,128], index: 1, kind: input, shape index: {}, may-alias: {0,1}]
  %s2 = inlined_call_operand.vmem [shape: bf16[128,64], index: 2, kind: input, shape index: {}]
  %s3 = inlined_call_operand.vmem [shape: f32[2,48,32], index: 3, kind: output, shape index: {}]
  %s4 = sld [smem:[#allocation0]]
  $region45: #{synthesis_forward.1} parent=0
    _
  %s6 = ssub.s32 1, %s4
  %s7 = scalar_select 0, %s6, %s4
  loop: start=0, step=1, limit=8
  $region2: #{synthesis_forward.1} parent=0 // loop_pre_header
    _
  $region3: #{synthesis_forward.1} parent=0 // loop_header
    %s9 = sphi 0, %s13
    %p10 = scmp.ge.s32.totalorder %s9, 8
    %s16 = sphi 0, %s28
    %s17 = sphi 0, %s24
    %s18 = sphi 0, %s16
    %s19 = sphi 0, %s17
    %s20 = sphi 0, %s18
    %s21 = sphi 0, %s19
    %s33 = sphi 0, %s35
    %s36 = sphi 0, %s33
    %s37 = sphi 0, %s36
    %s53 = sphi 0, %s37
    %s63 = sphi 0, %s65
    %s66 = sphi 0, %s63
    %s67 = sphi 0, %s66
    %s83 = sphi 0, %s67
    %s87 = sphi 0, %s87
    %s89 = sphi 0, %s87
    %s90 = sphi 0, %s89
    %s104 = sphi 0, %s90
    %s112 = sphi 0, %s114
    %s115 = sphi 0, %s112
    %s116 = sphi 0, %s115
    %s132 = sphi 0, %s116
  $region4: #{synthesis_forward.1} parent=0 // loop_header_branch
    %12 = sbr.rel (%p10) target = $region8
  $region5: #{synthesis_forward.1} parent=0 // loop_body
    %s14 = ssub.s32 %s9, 1
    %s15 = ssub.s32 %s9, 2
    %s22 = sadd.s32 1, %s17
    %p23 = scmp.ge.s32.totalorder %s22, 3
    %s24 = scalar_select %p23, 0, %s22
    %s25 = sadd.s32 1, %s16
    %s26 = scalar_select %p23, %s25, %s16
    %p27 = scmp.ge.s32.totalorder %s26, 2
    %s28 = scalar_select %p27, 0, %s26
    %s29 = ssub.s32 %s16, %s28
    %s30 = ssub.s32 %s17, %s24
    %s31 = sor.u32 %s29, %s30
    %p32 = scmp.eq.s32.totalorder %s31, 0
    %s34 = sadd.s32 %s33, 1
    %s35 = scalar_select %p32, %s33, %s34
    %p38 = pneg %p32
    %p39 = scmp.eq.s32.totalorder %s9, 5
    %p40 = por %p38, %p39
    %p41 = scmp.ne.s32.totalorder %s33, %s36
    %p42 = scmp.eq.s32.totalorder %s9, 0
    %p43 = por %p41, %p42
    %p44 = scmp.ne.s32.totalorder %s33, %s36
    %p45 = scmp.eq.s32.totalorder %s14, 5
    %p46 = por %p44, %p45
    %p47 = scmp.ne.s32.totalorder %s36, %s37
    %p48 = scmp.eq.s32.totalorder %s14, 0
    %p49 = por %p47, %p48
    %p50 = scmp.ne.s32.totalorder %s36, %s37
    %p51 = scmp.eq.s32.totalorder %s15, 5
    %p52 = por %p50, %p51
    %p54 = scmp.ne.s32.totalorder %s37, %s53
    %p55 = scmp.eq.s32.totalorder %s15, 0
    %p56 = por %p54, %p55
    %s57 = sadd.s32 %s17, 1
    %s58 = sadd.s32 %s24, 1
    %s59 = ssub.s32 %s16, %s28
    %s60 = ssub.s32 %s57, %s58
    %s61 = sor.u32 %s59, %s60
    %p62 = scmp.eq.s32.totalorder %s61, 0
    %s64 = sadd.s32 %s63, 1
    %s65 = scalar_select %p62, %s63, %s64
    %p68 = pneg %p62
    %p69 = scmp.eq.s32.totalorder %s9, 5
    %p70 = por %p68, %p69
    %p71 = scmp.ne.s32.totalorder %s63, %s66
    %p72 = scmp.eq.s32.totalorder %s9, 0
    %p73 = por %p71, %p72
    %p74 = scmp.ne.s32.totalorder %s63, %s66
    %p75 = scmp.eq.s32.totalorder %s14, 5
    %p76 = por %p74, %p75
    %p77 = scmp.ne.s32.totalorder %s66, %s67
    %p78 = scmp.eq.s32.totalorder %s14, 0
    %p79 = por %p77, %p78
    %p80 = scmp.ne.s32.totalorder %s66, %s67
    %p81 = scmp.eq.s32.totalorder %s15, 5
    %p82 = por %p80, %p81
    %p84 = scmp.ne.s32.totalorder %s67, %s83
    %p85 = scmp.eq.s32.totalorder %s15, 0
    %p86 = por %p84, %p85
    %s88 = sadd.s32 %s87, 1
    %p91 = scmp.eq.s32.totalorder %s9, 5
    %p92 = scmp.ne.s32.totalorder %s87, %s89
    %p93 = scmp.eq.s32.totalorder %s9, 0
    %p94 = por %p92, %p93
    %p95 = scmp.ne.s32.totalorder %s87, %s89
    %p96 = scmp.eq.s32.totalorder %s14, 5
    %p97 = por %p95, %p96
    %p98 = scmp.ne.s32.totalorder %s89, %s90
    %p99 = scmp.eq.s32.totalorder %s14, 0
    %p100 = por %p98, %p99
    %p101 = scmp.ne.s32.totalorder %s89, %s90
    %p102 = scmp.eq.s32.totalorder %s15, 5
    %p103 = por %p101, %p102
    %p105 = scmp.ne.s32.totalorder %s90, %s104
    %p106 = scmp.eq.s32.totalorder %s15, 0
    %p107 = por %p105, %p106
    %s108 = ssub.s32 %s16, %s28
    %s109 = ssub.s32 %s17, %s24
    %s110 = sor.u32 %s108, %s109
    %p111 = scmp.eq.s32.totalorder %s110, 0
    %s113 = sadd.s32 %s112, 1
    %s114 = scalar_select %p111, %s112, %s113
    %p117 = pneg %p111
    %p118 = scmp.eq.s32.totalorder %s9, 5
    %p119 = por %p117, %p118
    %p120 = scmp.ne.s32.totalorder %s112, %s115
    %p121 = scmp.eq.s32.totalorder %s9, 0
    %p122 = por %p120, %p121
    %p123 = scmp.ne.s32.totalorder %s112, %s115
    %p124 = scmp.eq.s32.totalorder %s14, 5
    %p125 = por %p123, %p124
    %p126 = scmp.ne.s32.totalorder %s115, %s116
    %p127 = scmp.eq.s32.totalorder %s14, 0
    %p128 = por %p126, %p127
    %p129 = scmp.ne.s32.totalorder %s115, %s116
    %p130 = scmp.eq.s32.totalorder %s15, 5
    %p131 = por %p129, %p130
    %p133 = scmp.ne.s32.totalorder %s116, %s132
    %p134 = scmp.eq.s32.totalorder %s15, 0
    %p135 = por %p133, %p134
    %p136 = scmp.le.s32.totalorder 1, %s9
    %p137 = scmp.lt.s32.totalorder %s9, 7
    %p138 = pnand %p136, %p137
    %p139 = pneg %p138
    // Predicated region
    $region9: #{synthesis_forward.1} parent=5 // pred_check
      _
    $region10: #{synthesis_forward.1} parent=5 // pred_check_branch
      %141 = sbr.rel (%p138) target = $region12
    $region11: #{synthesis_forward.1} parent=5 // pred_region
      %s142 = ssub.s32 %s9, 1
      // Predicated region
      $region13: #{synthesis_forward.1} parent=11 // pred_check
        %p143 = pneg %p100
      $region14: #{synthesis_forward.1} parent=11 // pred_check_branch
        %145 = sbr.rel (%p143) target = $region16
      $region15: #{synthesis_forward.1} parent=11 // pred_region
        _
      $region16: #{synthesis_forward.1} parent=11 // pred_fallthru
        _
    $region12: #{synthesis_forward.1} parent=5 // pred_fallthru
      _
    %p146 = scmp.lt.s32.totalorder %s9, 6
    // Predicated region
    $region17: #{synthesis_forward.1} parent=5 // pred_check
      %p147 = pneg %p146
    $region18: #{synthesis_forward.1} parent=5 // pred_check_branch
      %149 = sbr.rel (%p147) target = $region20
    $region19: #{synthesis_forward.1} parent=5 // pred_region
      // Predicated region
      $region21: #{synthesis_forward.1} parent=19 // pred_check
        %p150 = pneg %p43
      $region22: #{synthesis_forward.1} parent=19 // pred_check_branch
        %152 = sbr.rel (%p150) target = $region24
      $region23: #{synthesis_forward.1} parent=19 // pred_region
        %s153 = smul.u32 2, %s17
        %p154 = scmp.lt.s32.totalorder %s16, 1
        %s155 = scalar_select %p154, %s16, 1
        %p156 = scmp.lt.s32.totalorder %s153, 7
        %s157 = scalar_select %p156, %s153, 7
        %s158 = smul.addr %s155, 8
        %s159 = sadd.s32 %s157, %s158
        %s160 = smul.addr %s159, 4
        %s161 = scalar_lea.vmem %s0, %s160
        %s162 = smul.u32 2, %s17
      $region24: #{synthesis_forward.1} parent=19 // pred_fallthru
        _
      // Predicated region
      $region25: #{synthesis_forward.1} parent=19 // pred_check
        %p163 = pneg %p73
      $region26: #{synthesis_forward.1} parent=19 // pred_check_branch
        %165 = sbr.rel (%p163) target = $region28
      $region27: #{synthesis_forward.1} parent=19 // pred_region
        %s166 = sadd.s32 %s17, 1
        %s167 = smul.u32 2, %s166
        %p168 = scmp.lt.s32.totalorder %s16, 1
        %s169 = scalar_select %p168, %s16, 1
        %p170 = scmp.lt.s32.totalorder %s167, 7
        %s171 = scalar_select %p170, %s167, 7
        %s172 = smul.addr %s169, 8
        %s173 = sadd.s32 %s171, %s172
        %s174 = smul.addr %s173, 4
        %s175 = scalar_lea.vmem %s1, %s174
        %s176 = sadd.s32 %s17, 1
        %s177 = smul.u32 2, %s176
      $region28: #{synthesis_forward.1} parent=19 // pred_fallthru
        _
    $region20: #{synthesis_forward.1} parent=5 // pred_fallthru
      _
    %p178 = scmp.le.s32.totalorder 1, %s9
    %p179 = scmp.lt.s32.totalorder %s9, 7
    %p180 = pnand %p178, %p179
    %p181 = pneg %p180
    // Predicated region
    $region29: #{synthesis_forward.1} parent=5 // pred_check
      _
    $region30: #{synthesis_forward.1} parent=5 // pred_check_branch
      %183 = sbr.rel (%p180) target = $region32
    $region31: #{synthesis_forward.1} parent=5 // pred_region
      %s184 = ssub.s32 %s9, 1
      %s185 = smul.u32 2, %s19
      %p186 = scmp.lt.s32.totalorder %s18, 1
      %s187 = scalar_select %p186, %s18, 1
      %p188 = scmp.lt.s32.totalorder %s185, 7
      %s189 = scalar_select %p188, %s185, 7
      %s190 = smul.addr %s187, 8
      %s191 = sadd.s32 %s189, %s190
      %s192 = smul.addr %s191, 4
      %s193 = scalar_lea.vmem %s0, %s192
      %p194 = pneg %p49
      %p195 = pneg %p46
      %s196 = sadd.s32 %s19, 1
      %s197 = smul.u32 2, %s196
      %p198 = scmp.lt.s32.totalorder %s18, 1
      %s199 = scalar_select %p198, %s18, 1
      %p200 = scmp.lt.s32.totalorder %s197, 7
      %s201 = scalar_select %p200, %s197, 7
      %s202 = smul.addr %s199, 8
      %s203 = sadd.s32 %s201, %s202
      %s204 = smul.addr %s203, 4
      %s205 = scalar_lea.vmem %s1, %s204
      %p206 = pneg %p79
      %p207 = pneg %p76
      %p208 = pneg %p100
      %p209 = pneg %p97
      %p210 = pneg %p128
      %p211 = pneg %p125
      %s212 = smul.u32 2, %s19
      %p213 = scmp.lt.s32.totalorder %s18, 1
      %s214 = scalar_select %p213, %s18, 1
      %p215 = scmp.lt.s32.totalorder %s212, 5
      %s216 = scalar_select %p215, %s212, 5
      %s217 = smul.addr %s214, 6
      %s218 = sadd.s32 %s216, %s217
      %s219 = smul.addr %s218, 8
      %s220 = scalar_lea.vmem %s3, %s219
      %s221 = smul.u32 2, %s19
      %p222 = scmp.lt.s32.totalorder %s18, 1
      %s223 = scalar_select %p222, %s18, 1
      %p224 = scmp.lt.s32.totalorder %s221, 7
      %s225 = scalar_select %p224, %s221, 7
      %s226 = smul.addr %s223, 8
      %s227 = sadd.s32 %s225, %s226
      %s228 = smul.addr %s227, 4
      %s229 = scalar_lea.vmem %s0, %s228
      %s230 = smul.u32 2, %s19
      %s231 = sadd.s32 %s19, 1
      %s232 = smul.u32 2, %s231
      %p233 = scmp.lt.s32.totalorder %s18, 1
      %s234 = scalar_select %p233, %s18, 1
      %p235 = scmp.lt.s32.totalorder %s232, 7
      %s236 = scalar_select %p235, %s232, 7
      %s237 = smul.addr %s234, 8
      %s238 = sadd.s32 %s236, %s237
      %s239 = smul.addr %s238, 4
      %s240 = scalar_lea.vmem %s1, %s239
      %s241 = sadd.s32 %s19, 1
      %s242 = smul.u32 2, %s241
      %s243 = smul.u32 2, %s19
      %p244 = scmp.lt.s32.totalorder %s18, 1
      %s245 = scalar_select %p244, %s18, 1
      %p246 = scmp.lt.s32.totalorder %s243, 5
      %s247 = scalar_select %p246, %s243, 5
      %s248 = smul.addr %s245, 6
      %s249 = sadd.s32 %s247, %s248
      %s250 = smul.addr %s249, 8
      %s251 = scalar_lea.vmem %s3, %s250
      %s252 = smul.u32 2, %s19
      %v254 = vld [vmem:[%s229] sm:$0xf]
      %v255 = vld [vmem:[%s229 + $0x4] sm:$0xf]
      %v256 = vld [vmem:[%s240] sm:$0xf]
      %v257 = vld [vmem:[%s240 + $0x4] sm:$0xf]
      %v260 = vunpack.c.l.b16 %v254
      %v261 = vunpack.c.l.b16 %v255
      %v262 = vpack.c.b16 %v261, %v260
      %v266 = vunpack.c.l.b16 %v256
      %v267 = vunpack.c.l.b16 %v257
      %v268 = vpack.c.b16 %v267, %v266
      %v270 = vld [vmem:[%s2] sm:$0xf]
      %v271 = vld [vmem:[%s2 + $0x4] sm:$0xf]
      %v272 = vld [vmem:[%s2 + $0x8] sm:$0xf]
      %v273 = vld [vmem:[%s2 + $0xc] sm:$0xf]
      %v274 = vld [vmem:[%s2 + $0x10] sm:$0xf]
      %v275 = vld [vmem:[%s2 + $0x14] sm:$0xf]
      %v276 = vld [vmem:[%s2 + $0x18] sm:$0xf]
      %v277 = vld [vmem:[%s2 + $0x1c] sm:$0xf]
      %v278 = vld [vmem:[%s2 + $0x20] sm:$0xf]
      %v279 = vld [vmem:[%s2 + $0x24] sm:$0xf]
      %v280 = vld [vmem:[%s2 + $0x28] sm:$0xf]
      %v281 = vld [vmem:[%s2 + $0x2c] sm:$0xf]
      %v282 = vld [vmem:[%s2 + $0x30] sm:$0xf]
      %v283 = vld [vmem:[%s2 + $0x34] sm:$0xf]
      %v284 = vld [vmem:[%s2 + $0x38] sm:$0xf]
      %v285 = vld [vmem:[%s2 + $0x3c] sm:$0xf]
      %v302 = vunpack.c.l.b16 %v270
      %v303 = vunpack.c.l.b16 %v271
      %v304 = vunpack.c.l.b16 %v272
      %v305 = vunpack.c.l.b16 %v273
      %v306 = vunpack.c.l.b16 %v274
      %v307 = vunpack.c.l.b16 %v275
      %v308 = vunpack.c.l.b16 %v276
      %v309 = vunpack.c.l.b16 %v277
      %v310 = vunpack.c.l.b16 %v278
      %v311 = vunpack.c.l.b16 %v279
      %v312 = vunpack.c.l.b16 %v280
      %v313 = vunpack.c.l.b16 %v281
      %v314 = vunpack.c.l.b16 %v282
      %v315 = vunpack.c.l.b16 %v283
      %v316 = vunpack.c.l.b16 %v284
      %v317 = vunpack.c.l.b16 %v285
      %v318 = vpack.c.b16 %v303, %v302
      %v319 = vpack.c.b16 %v305, %v304
      %v320 = vpack.c.b16 %v307, %v306
      %v321 = vpack.c.b16 %v309, %v308
      %v322 = vpack.c.b16 %v311, %v310
      %v323 = vpack.c.b16 %v313, %v312
      %v324 = vpack.c.b16 %v315, %v314
      %v325 = vpack.c.b16 %v317, %v316
      %334 = vmatprep.subr.bf16.mxu0 0
      %335 = vmatpush1.bf16.msra.mxu0 %v325
      %336 = vmatprep.subr.bf16.mxu0 0
      %337 = vmatpush1.bf16.msra.mxu0 %v324
      %338 = vmatprep.subr.bf16.mxu0 0
      %339 = vmatpush1.bf16.msra.mxu0 %v323
      %340 = vmatprep.subr.bf16.mxu0 0
      %341 = vmatpush1.bf16.msra.mxu0 %v322
      %342 = vmatprep.subr.bf16.mxu0 0
      %343 = vmatpush1.bf16.msra.mxu0 %v321
      %344 = vmatprep.subr.bf16.mxu0 0
      %345 = vmatpush1.bf16.msra.mxu0 %v320
      %346 = vmatprep.subr.bf16.mxu0 0
      %347 = vmatpush1.bf16.msra.mxu0 %v319
      %348 = vmatprep.subr.bf16.mxu0 0
      %349 = vmatpush1.bf16.msra.mxu0 %v318
      %350 = vmatprep.subr.bf16.mxu0 0
      %351 = vmatpush2.bf16.msra.mxu0 0
      %352 = vmatprep.subr.bf16.mxu0 0
      %353 = vmatpush2.bf16.msra.mxu0 0
      %354 = vmatprep.subr.bf16.mxu0 0
      %355 = vmatpush2.bf16.msra.mxu0 0
      %356 = vmatprep.subr.bf16.mxu0 0
      %357 = vmatpush2.bf16.msra.mxu0 0
      %358 = vmatprep.subr.bf16.mxu0 0
      %359 = vmatpush2.bf16.msra.mxu0 0
      %360 = vmatprep.subr.bf16.mxu0 0
      %361 = vmatpush2.bf16.msra.mxu0 0
      %362 = vmatprep.subr.bf16.mxu0 0
      %363 = vmatpush2.bf16.msra.mxu0 0
      %364 = vmatprep.subr.bf16.mxu0 0
      %365 = vmatpush2.bf16.msra.mxu0 0
      %366 = vmatprep.mubr.bf16.mxu0 0
      %367 = vmatmul.mubr.bf16.gmra.mxu0 %v262
      %v368 = vpop.f32.mrf.mxu0
      %v369 = vadd.f32 0.0, %v368
      %v370 = vpop.f32.mrf.mxu0
      %v371 = vpop.f32.mrf.mxu0
      %v372 = vadd.f32 0.0, %v371
      %v373 = vpop.f32.mrf.mxu0
      %374 = vmatprep.mubr.bf16.mxu0 0
      %375 = vmatmul.mubr.bf16.gmra.mxu0 %v268
      %v376 = vpop.f32.mrf.mxu0
      %v377 = vadd.f32 0.0, %v376
      %v378 = vpop.f32.mrf.mxu0
      %v379 = vpop.f32.mrf.mxu0
      %v380 = vpop.f32.mrf.mxu0
      %381 = vdwg.mxu0
      %vm385 = vcmask 1046528
      %v386 = vrot.slane %v369, 1
      %v387 = vrot.slane %v372, 1
      %v388 = vsel %vm385, %v386, %v387
      %v389 = vrot.slane %v377, 1
      %v390 = vsel %vm385, %v387, %v389
      %391 = vrot.lane.b32.xlu0 %v388, 96
      %v392 = vpop.permute.xlu0 %391
      %393 = vrot.lane.b32.xlu0 %v390, 96
      %v394 = vpop.permute.xlu0 %393
      %v397 = vadd.f32 %v369, %v392
      %v398 = vadd.f32 %v372, %v394
      %vm399 = vcmask 261120
      %400 = vst.msk [vmem:[%s251] sm:$0xff] %vm399, %v397
      %401 = vst.msk [vmem:[%s251 + $0x8] sm:$0xff] %vm399, %v398
      %s402 = smul.u32 2, %s19
      %p403 = scmp.lt.s32.totalorder %s18, 1
      %s404 = scalar_select %p403, %s18, 1
      %p405 = scmp.lt.s32.totalorder %s402, 5
      %s406 = scalar_select %p405, %s402, 5
      %s407 = smul.addr %s404, 6
      %s408 = sadd.s32 %s406, %s407
      %s409 = smul.addr %s408, 8
      %s410 = scalar_lea.vmem %s3, %s409
      // Predicated region
      $region33: #{synthesis_forward.1} parent=31 // pred_check
        %p411 = pneg %p125
      $region34: #{synthesis_forward.1} parent=31 // pred_check_branch
        %413 = sbr.rel (%p411) target = $region36
      $region35: #{synthesis_forward.1} parent=31 // pred_region
        %s414 = smul.u32 2, %s19
      $region36: #{synthesis_forward.1} parent=31 // pred_fallthru
        _
    $region32: #{synthesis_forward.1} parent=5 // pred_fallthru
      _
    %p415 = scmp.le.s32.totalorder 2, %s9
    // Predicated region
    $region37: #{synthesis_forward.1} parent=5 // pred_check
      %p416 = pneg %p415
    $region38: #{synthesis_forward.1} parent=5 // pred_check_branch
      %418 = sbr.rel (%p416) target = $region40
    $region39: #{synthesis_forward.1} parent=5 // pred_region
      %s419 = ssub.s32 %s9, 2
      // Predicated region
      $region41: #{synthesis_forward.1} parent=39 // pred_check
        %p420 = pneg %p131
      $region42: #{synthesis_forward.1} parent=39 // pred_check_branch
        %422 = sbr.rel (%p420) target = $region44
      $region43: #{synthesis_forward.1} parent=39 // pred_region
        %s423 = smul.u32 2, %s21
        %p424 = scmp.lt.s32.totalorder %s20, 1
        %s425 = scalar_select %p424, %s20, 1
        %p426 = scmp.lt.s32.totalorder %s423, 5
        %s427 = scalar_select %p426, %s423, 5
        %s428 = smul.addr %s425, 6
        %s429 = sadd.s32 %s427, %s428
        %s430 = smul.addr %s429, 8
        %s431 = scalar_lea.vmem %s3, %s430
      $region44: #{synthesis_forward.1} parent=39 // pred_fallthru
        _
    $region40: #{synthesis_forward.1} parent=5 // pred_fallthru
      _
  $region6: #{synthesis_forward.1} parent=0 // loop_footer
    %s13 = sadd.s32 1, %s9
  $region7: #{synthesis_forward.1} parent=0 // loop_footer_branch
    %8 = sbr.rel target = $region3
  $region8: #{synthesis_forward.1} parent=0 // loop_exit
    _

</llo_original>
